<compile_context>
chip_gen: v5e
topology: v5e:2x2
jax: 0.10.0
libtpu: 0.0.40
codegen_flags: <defaults>
</compile_context>

<pallas_src>
import jax
import jax.numpy as jnp
from jax.experimental import pallas as pl
from jax.experimental.pallas import tpu as pltpu

_MIB = 1024 * 1024


def _fbn3d_kernel(s_ref, b_ref, x_ref, o_ref):
    # x_ref: (row_tile, lane_tile); s_ref/b_ref: (row_tile, 1) f32.
    x = x_ref[...].astype(jnp.float32)
    o_ref[...] = (x * s_ref[...] + b_ref[...]).astype(o_ref.dtype)


def _device_budgets():
    """(max_block_bytes, vmem_cap_bytes) tuned per TPU generation."""
    try:
        kind = jax.devices()[0].device_kind.lower()
    except Exception:  # pragma: no cover - defensive
        kind = ""
    if "v7" in kind:
        # 64 MiB VMEM / TC, 3.2 TB/s HBM: keep blocks ~3 MiB, tight VMEM cap.
        return 3 * _MIB, 28 * _MIB
    if "v6" in kind:
        # 128 MiB VMEM: larger blocks are free roofline headroom.
        return 6 * _MIB, 48 * _MIB
    # v5e / unknown: conservative default.
    return 4 * _MIB, 32 * _MIB


def _pick_split(N, C, D, H, W):
    """Pick (rows, cols) so cols maps lane-dense (multiple of 128) if possible.

    Per-(row) scale/shift repeat along D and H, so any of these splits is
    semantically identical; prefer the largest cols (longest DMA runs, fewest
    param rows).
    """
    if (D * H * W) % 128 == 0:
        return N * C, D * H * W
    if (H * W) % 128 == 0:
        return N * C * D, H * W
    if W % 128 == 0:
        return N * C * D * H, W
    # Fallback: full-width lane blocks (always legal); bytes bounded by rows
    # in _pick_tiles.  Odd widths will use masked stores.
    # TODO(synk): could pad cols to a multiple of 128 for huge unaligned DHW.
    return N * C, D * H * W


def _pick_tiles(rows, cols, itemsize, max_block_bytes):
    """Budget-driven (row_tile, lane_tile): grow lanes first, then rows."""
    sub = {4: 8, 2: 16, 1: 32}.get(itemsize, 8)

    if cols % 128 == 0:
        # Lane tile first: as wide as the budget allows at a minimal row tile.
        lane_cap = max(128, (max_block_bytes // (sub * itemsize)) // 128 * 128)
        lane_tile = min(cols, lane_cap)
    else:
        lane_tile = cols  # full-dim lane block is always legal

    # Row tile fills the remaining budget (multiple of sub, or full dim).
    row_cap = max(sub, (max_block_bytes // (lane_tile * itemsize)) // sub * sub)
    row_tile = rows if rows <= row_cap else row_cap

    # Megacore: make sure the grid has >=2 steps along a parallel axis when
    # the whole tensor would otherwise fit a single block (v7x has 2 TCs).
    if pl.cdiv(rows, row_tile) * pl.cdiv(cols, lane_tile) == 1:
        if row_tile % (2 * sub) == 0 and row_tile >= 2 * sub:
            row_tile //= 2
        elif lane_tile % 256 == 0 and lane_tile >= 256:
            lane_tile //= 2

    return row_tile, lane_tile


def frozen_batch_norm_3d(x, weight, bias, running_mean, running_var,
                         donate_x=False):
    """x: (N, C, D, H, W). weight/bias/running_mean/running_var: (C,)."""
    N, C, D, H, W = x.shape

    # Mirror the PyTorch module: params are cast to half first when x is fp16
    # and the affine transform uses rsqrt with NO eps.
    param_dtype = x.dtype if x.dtype == jnp.float16 else jnp.float32
    w = weight.astype(param_dtype)
    b = bias.astype(param_dtype)
    rm = running_mean.astype(param_dtype)
    rv = running_var.astype(param_dtype)

    scale_c = w * jax.lax.rsqrt(rv)          # (C,)
    shift_c = b - rm * scale_c               # (C,)

    rows, cols = _pick_split(N, C, D, H, W)
    extra = rows // (N * C)                  # 1, D, or D*H

    # Per-row params in the SAME flattened order as x.reshape(rows, cols).
    scale_r = jnp.broadcast_to(
        scale_c.astype(jnp.float32).reshape(1, C, 1), (N, C, extra)
    ).reshape(rows, 1)
    shift_r = jnp.broadcast_to(
        shift_c.astype(jnp.float32).reshape(1, C, 1), (N, C, extra)
    ).reshape(rows, 1)

    # Free view for contiguous NCDHW (non-default layouts would copy here).
    x2d = x.reshape(rows, cols)

    itemsize = jnp.dtype(x.dtype).itemsize
    max_block_bytes, vmem_cap = _device_budgets()
    row_tile, lane_tile = _pick_tiles(rows, cols, itemsize, max_block_bytes)
    grid = (pl.cdiv(rows, row_tile), pl.cdiv(cols, lane_tile))

    # VMEM budget: in + out, double-buffered, plus tiny param tiles + headroom.
    block_bytes = row_tile * lane_tile * itemsize
    vmem_limit = int(max(16 * _MIB, min(vmem_cap, 6 * block_bytes)))

    x_spec = pl.BlockSpec((row_tile, lane_tile), lambda i, j: (i, j))
    p_spec = pl.BlockSpec((row_tile, 1), lambda i, j: (i, 0))

    cost = pl.CostEstimate(
        flops=2 * rows * cols,
        transcendentals=0,
        bytes_accessed=2 * rows * cols * itemsize + 2 * rows * 4,
    )

    out2d = pl.pallas_call(
        _fbn3d_kernel,
        out_shape=jax.ShapeDtypeStruct((rows, cols), x.dtype),
        grid=grid,
        in_specs=[p_spec, p_spec, x_spec],
        out_specs=x_spec,
        compiler_params=pltpu.CompilerParams(
            dimension_semantics=("parallel", "parallel"),
            vmem_limit_bytes=vmem_limit,
        ),
        cost_estimate=cost,
        input_output_aliases=({2: 0} if donate_x else {}),
    )(scale_r, shift_r, x2d)

    return out2d.reshape(N, C, D, H, W)


def frozen_batch_norm_3d_ref(x, weight, bias, running_mean, running_var):
    scale = weight * jax.lax.rsqrt(running_var)
    shift = bias - running_mean * scale
    scale = scale.reshape(1, -1, 1, 1, 1)
    shift = shift.reshape(1, -1, 1, 1, 1)
    return (x * scale + shift).astype(x.dtype)


if __name__ == "__main__":
    key = jax.random.PRNGKey(0)
    k1, k2, k3, k4 = jax.random.split(key, 4)

    N, C, D, H, W = 2, 4, 4, 8, 16
    x = jax.random.normal(k1, (N, C, D, H, W), dtype=jnp.float32)

    # Deterministic "frozen" buffers (module defaults are ones/zeros; perturb
    # them deterministically so the affine transform is non-trivial).
    weight = jnp.ones((C,), jnp.float32) + 0.1 * jax.random.normal(k2, (C,))
    bias = jnp.zeros((C,), jnp.float32) + 0.1 * jax.random.normal(k3, (C,))
    running_mean = 0.1 * jax.random.normal(k4, (C,))
    running_var = jnp.ones((C,), jnp.float32) + 0.05 * jnp.arange(C, dtype=jnp.float32)

    out = frozen_batch_norm_3d(x, weight, bias, running_mean, running_var)
    out = jax.block_until_ready(out)

    ref = frozen_batch_norm_3d_ref(x, weight, bias, running_mean, running_var)
    assert out.shape == ref.shape and out.dtype == ref.dtype
    assert jnp.allclose(out, ref, atol=1e-5, rtol=1e-5)

    print("KERNEL_OK")
</pallas_src>

<mosaic_0001>
module attributes {stable_mosaic.version = 11 : i64} {
  func.func @_fbn3d_kernel(%arg0: i32, %arg1: i32, %arg2: memref<8x1xf32, #tpu.memory_space<vmem>>, %arg3: memref<8x1xf32, #tpu.memory_space<vmem>>, %arg4: memref<8x256xf32, #tpu.memory_space<vmem>>, %arg5: memref<8x256xf32, #tpu.memory_space<vmem>>) attributes {dimension_semantics = [#tpu.dimension_semantics<parallel>, #tpu.dimension_semantics<parallel>], iteration_bounds = array<i64: 1, 2>, scalar_prefetch = 0 : i64, scratch_operands = 0 : i64, tpu.core_type = #tpu.core_type<tc>, window_params = [{transform_indices = @transform_0, window_bounds = array<i64: 8, 1>}, {transform_indices = @transform_1, window_bounds = array<i64: 8, 1>}, {transform_indices = @transform_2, window_bounds = array<i64: 8, 256>}, {transform_indices = @transform_3, window_bounds = array<i64: 8, 256>}]} {
    %c0 = arith.constant 0 : index
    %c0_0 = arith.constant 0 : index
    %0 = vector.load %arg4[%c0, %c0_0] : memref<8x256xf32, #tpu.memory_space<vmem>>, vector<8x256xf32>
    %c0_1 = arith.constant 0 : index
    %c0_2 = arith.constant 0 : index
    %1 = vector.load %arg2[%c0_1, %c0_2] : memref<8x1xf32, #tpu.memory_space<vmem>>, vector<8x1xf32>
    %2 = vector.broadcast %1 : vector<8x1xf32> to vector<8x256xf32>
    %3 = arith.mulf %0, %2 : vector<8x256xf32>
    %c0_3 = arith.constant 0 : index
    %c0_4 = arith.constant 0 : index
    %4 = vector.load %arg3[%c0_3, %c0_4] : memref<8x1xf32, #tpu.memory_space<vmem>>, vector<8x1xf32>
    %5 = vector.broadcast %4 : vector<8x1xf32> to vector<8x256xf32>
    %6 = arith.addf %3, %5 : vector<8x256xf32>
    %c0_5 = arith.constant 0 : index
    %c0_6 = arith.constant 0 : index
    %7 = vector.load %arg5[%c0_5, %c0_6] : memref<8x256xf32, #tpu.memory_space<vmem>>, vector<8x256xf32>
    tpu.vector_store %arg5[%c0_5, %c0_6], %6 {strides = array<i32>} : memref<8x256xf32, #tpu.memory_space<vmem>>, vector<8x256xf32>,
    return
  }
  func.func @transform_0(%arg0: i32, %arg1: i32) -> (i32, i32) {
    %c0_i32 = arith.constant 0 : i32
    %c0_i32_0 = arith.constant 0 : i32
    return %arg0, %c0_i32 : i32, i32
  }
  func.func @transform_1(%arg0: i32, %arg1: i32) -> (i32, i32) {
    %c0_i32 = arith.constant 0 : i32
    %c0_i32_0 = arith.constant 0 : i32
    return %arg0, %c0_i32 : i32, i32
  }
  func.func @transform_2(%arg0: i32, %arg1: i32) -> (i32, i32) {
    %c0_i32 = arith.constant 0 : i32
    return %arg0, %arg1 : i32, i32
  }
  func.func @transform_3(%arg0: i32, %arg1: i32) -> (i32, i32) {
    %c0_i32 = arith.constant 0 : i32
    return %arg0, %arg1 : i32, i32
  }
}

</mosaic_0001>

<llo_original>
// kernel: tpu_custom_call.1
$region0: #{tpu_custom_call.1}
  #allocation0 [shape = 'u32[]', space=smem, size = 0x4, offset = 0x4, fixed_abs, tag = 'smem constant byte address 0x4 - core index']
  #allocation1 [shape = 'u32[72,128]{1,0:T(1,128)}', space=vmem, size = 0x9000, scoped, tag = 'internal scratch']
  %s0 = inlined_call_operand.vmem [shape: f32[8,1], index: 0, kind: input, shape index: {}]
  %s1 = inlined_call_operand.vmem [shape: f32[8,1], index: 1, kind: input, shape index: {}]
  %s2 = inlined_call_operand.hbm [shape: f32[8,512], index: 2, kind: input, shape index: {}]
  %s3 = inlined_call_operand.hbm [shape: f32[8,512], index: 3, kind: output, shape index: {}]
  %s4 = sld [smem:[#allocation0]]
  $region49: #{tpu_custom_call.1} parent=0
    _
  %s6 = ssub.s32 1, %s4
  %s7 = scalar_select 0, %s6, %s4
  $region1: #{tpu_custom_call.1} parent=0
    #allocation2 [shape = 'u8[16384]{0}', space=vmem, size = 0x4000, scoped, tag = 'input window, operand 2']
    #allocation3 [shape = 's32[2]{0}', space=sflag, size = 0x8, scoped, tag = 'scoped memory for tpu_custom_call.1']
    #allocation4 [shape = 's32[2]{0}', space=sflag, size = 0x8, scoped, tag = 'scoped memory for tpu_custom_call.1']
    #allocation5 [shape = 'u8[16384]{0}', space=vmem, size = 0x4000, scoped, tag = 'output window, operand 0']
    %8 = vsyncpa [#allocation3], 0
    %s9 = scalar_lea.sflag [#allocation3], 1
    %10 = vsyncpa %s9, 0
    %11 = vsyncpa [#allocation4], 0
    %s12 = scalar_lea.sflag [#allocation4], 1
    %13 = vsyncpa %s12, 0
    loop: start=0, step=1, limit=4
    $region2: #{tpu_custom_call.1} parent=1 // loop_pre_header
      _
    $region3: #{tpu_custom_call.1} parent=1 // loop_header
      %s15 = sphi 0, %s19
      %p16 = scmp.ge.s32.totalorder %s15, 4
      %s22 = sphi 0, %s34
      %s23 = sphi 0, %s30
      %s24 = sphi 0, %s22
      %s25 = sphi 0, %s23
      %s26 = sphi 0, %s24
      %s27 = sphi 0, %s25
      %s37 = sphi 0, %s39
      %s40 = sphi 0, %s37
      %s41 = sphi 0, %s40
      %s57 = sphi 0, %s41
      %s63 = sphi 0, %s65
      %s66 = sphi 0, %s63
      %s67 = sphi 0, %s66
      %s83 = sphi 0, %s67
      %s91 = sphi 0, %s93
      %s94 = sphi 0, %s91
      %s95 = sphi 0, %s94
      %s111 = sphi 0, %s95
      %s119 = sphi 0, %s121
      %s122 = sphi 0, %s119
      %s123 = sphi 0, %s122
      %s139 = sphi 0, %s123
    $region4: #{tpu_custom_call.1} parent=1 // loop_header_branch
      %18 = sbr.rel (%p16) target = $region8
    $region5: #{tpu_custom_call.1} parent=1 // loop_body
      %s20 = ssub.s32 %s15, 1
      %s21 = ssub.s32 %s15, 2
      %s28 = sadd.s32 1, %s23
      %p29 = scmp.ge.s32.totalorder %s28, 2
      %s30 = scalar_select %p29, 0, %s28
      %s31 = sadd.s32 1, %s22
      %s32 = scalar_select %p29, %s31, %s22
      %p33 = scmp.ge.s32.totalorder %s32, 1
      %s34 = scalar_select %p33, 0, %s32
      %s35 = ssub.s32 %s22, %s34
      %p36 = scmp.eq.s32.totalorder %s35, 0
      %s38 = sadd.s32 %s37, 1
      %s39 = scalar_select %p36, %s37, %s38
      %p42 = pneg %p36
      %p43 = scmp.eq.s32.totalorder %s15, 1
      %p44 = por %p42, %p43
      %p45 = scmp.ne.s32.totalorder %s37, %s40
      %p46 = scmp.eq.s32.totalorder %s15, 0
      %p47 = por %p45, %p46
      %p48 = scmp.ne.s32.totalorder %s37, %s40
      %p49 = scmp.eq.s32.totalorder %s20, 1
      %p50 = por %p48, %p49
      %p51 = scmp.ne.s32.totalorder %s40, %s41
      %p52 = scmp.eq.s32.totalorder %s20, 0
      %p53 = por %p51, %p52
      %p54 = scmp.ne.s32.totalorder %s40, %s41
      %p55 = scmp.eq.s32.totalorder %s21, 1
      %p56 = por %p54, %p55
      %p58 = scmp.ne.s32.totalorder %s41, %s57
      %p59 = scmp.eq.s32.totalorder %s21, 0
      %p60 = por %p58, %p59
      %s61 = ssub.s32 %s22, %s34
      %p62 = scmp.eq.s32.totalorder %s61, 0
      %s64 = sadd.s32 %s63, 1
      %s65 = scalar_select %p62, %s63, %s64
      %p68 = pneg %p62
      %p69 = scmp.eq.s32.totalorder %s15, 1
      %p70 = por %p68, %p69
      %p71 = scmp.ne.s32.totalorder %s63, %s66
      %p72 = scmp.eq.s32.totalorder %s15, 0
      %p73 = por %p71, %p72
      %p74 = scmp.ne.s32.totalorder %s63, %s66
      %p75 = scmp.eq.s32.totalorder %s20, 1
      %p76 = por %p74, %p75
      %p77 = scmp.ne.s32.totalorder %s66, %s67
      %p78 = scmp.eq.s32.totalorder %s20, 0
      %p79 = por %p77, %p78
      %p80 = scmp.ne.s32.totalorder %s66, %s67
      %p81 = scmp.eq.s32.totalorder %s21, 1
      %p82 = por %p80, %p81
      %p84 = scmp.ne.s32.totalorder %s67, %s83
      %p85 = scmp.eq.s32.totalorder %s21, 0
      %p86 = por %p84, %p85
      %s87 = ssub.s32 %s22, %s34
      %s88 = ssub.s32 %s23, %s30
      %s89 = sor.u32 %s87, %s88
      %p90 = scmp.eq.s32.totalorder %s89, 0
      %s92 = sadd.s32 %s91, 1
      %s93 = scalar_select %p90, %s91, %s92
      %p96 = pneg %p90
      %p97 = scmp.eq.s32.totalorder %s15, 1
      %p98 = por %p96, %p97
      %p99 = scmp.ne.s32.totalorder %s91, %s94
      %p100 = scmp.eq.s32.totalorder %s15, 0
      %p101 = por %p99, %p100
      %p102 = scmp.ne.s32.totalorder %s91, %s94
      %p103 = scmp.eq.s32.totalorder %s20, 1
      %p104 = por %p102, %p103
      %p105 = scmp.ne.s32.totalorder %s94, %s95
      %p106 = scmp.eq.s32.totalorder %s20, 0
      %p107 = por %p105, %p106
      %p108 = scmp.ne.s32.totalorder %s94, %s95
      %p109 = scmp.eq.s32.totalorder %s21, 1
      %p110 = por %p108, %p109
      %p112 = scmp.ne.s32.totalorder %s95, %s111
      %p113 = scmp.eq.s32.totalorder %s21, 0
      %p114 = por %p112, %p113
      %s115 = ssub.s32 %s22, %s34
      %s116 = ssub.s32 %s23, %s30
      %s117 = sor.u32 %s115, %s116
      %p118 = scmp.eq.s32.totalorder %s117, 0
      %s120 = sadd.s32 %s119, 1
      %s121 = scalar_select %p118, %s119, %s120
      %p124 = pneg %p118
      %p125 = scmp.eq.s32.totalorder %s15, 1
      %p126 = por %p124, %p125
      %p127 = scmp.ne.s32.totalorder %s119, %s122
      %p128 = scmp.eq.s32.totalorder %s15, 0
      %p129 = por %p127, %p128
      %p130 = scmp.ne.s32.totalorder %s119, %s122
      %p131 = scmp.eq.s32.totalorder %s20, 1
      %p132 = por %p130, %p131
      %p133 = scmp.ne.s32.totalorder %s122, %s123
      %p134 = scmp.eq.s32.totalorder %s20, 0
      %p135 = por %p133, %p134
      %p136 = scmp.ne.s32.totalorder %s122, %s123
      %p137 = scmp.eq.s32.totalorder %s21, 1
      %p138 = por %p136, %p137
      %p140 = scmp.ne.s32.totalorder %s123, %s139
      %p141 = scmp.eq.s32.totalorder %s21, 0
      %p142 = por %p140, %p141
      %p143 = scmp.le.s32.totalorder 1, %s15
      %p144 = scmp.lt.s32.totalorder %s15, 3
      %p145 = pnand %p143, %p144
      %p146 = pneg %p145
      // Predicated region
      $region9: #{tpu_custom_call.1} parent=5 // pred_check
        _
      $region10: #{tpu_custom_call.1} parent=5 // pred_check_branch
        %148 = sbr.rel (%p145) target = $region12
      $region11: #{tpu_custom_call.1} parent=5 // pred_region
        %s149 = ssub.s32 %s15, 1
        // Predicated region
        $region13: #{tpu_custom_call.1} parent=11 // pred_check
          %p150 = pneg %p53
        $region14: #{tpu_custom_call.1} parent=11 // pred_check_branch
          %152 = sbr.rel (%p150) target = $region16
        $region15: #{tpu_custom_call.1} parent=11 // pred_region
          %p153 = scmp.lt.s32.totalorder %s24, 0
          %s154 = scalar_select %p153, %s24, 0
          %s155 = smul.addr %s154, 8
          %s156 = scalar_lea.vmem %s0, %s155
        $region16: #{tpu_custom_call.1} parent=11 // pred_fallthru
          _
        // Predicated region
        $region17: #{tpu_custom_call.1} parent=11 // pred_check
          %p157 = pneg %p79
        $region18: #{tpu_custom_call.1} parent=11 // pred_check_branch
          %159 = sbr.rel (%p157) target = $region20
        $region19: #{tpu_custom_call.1} parent=11 // pred_region
          %p160 = scmp.lt.s32.totalorder %s24, 0
          %s161 = scalar_select %p160, %s24, 0
          %s162 = smul.addr %s161, 8
          %s163 = scalar_lea.vmem %s1, %s162
        $region20: #{tpu_custom_call.1} parent=11 // pred_fallthru
          _
      $region12: #{tpu_custom_call.1} parent=5 // pred_fallthru
        _
      %p164 = scmp.lt.s32.totalorder %s15, 2
      // Predicated region
      $region21: #{tpu_custom_call.1} parent=5 // pred_check
        %p165 = pneg %p164
      $region22: #{tpu_custom_call.1} parent=5 // pred_check_branch
        %167 = sbr.rel (%p165) target = $region24
      $region23: #{tpu_custom_call.1} parent=5 // pred_region
        // Predicated region
        $region25: #{tpu_custom_call.1} parent=23 // pred_check
          %p168 = pneg %p101
        $region26: #{tpu_custom_call.1} parent=23 // pred_check_branch
          %170 = sbr.rel (%p168) target = $region28
        $region27: #{tpu_custom_call.1} parent=23 // pred_region
          %s171 = sand.u32 %s91, 1
          %s172 = scalar_lea.sflag [#allocation3], %s171
          %s173 = sand.u32 %s91, 1
          %s174 = smul.addr %s173, 16
          %s175 = scalar_lea.vmem [#allocation2], %s174
          %s176 = smul.u32 2, %s23
          %178 = vsyncadd %s172, 0
          %s179 = smul.addr %s22, 4
          %s180 = sadd.s32 %s176, %s179
          %s181 = smul.addr %s180, 8
          %s182 = scalar_lea.hbm %s2, %s181
          %s184 = sshll.u32 %s182, 4
          %s185 = int_to_ptr.hbm [resolvable:$true] %s184
          %s186 = sshll.u32 %s175, 4
          %s187 = int_to_ptr.vmem [resolvable:$true] %s186
          %189 = dma.hbm_to_vmem [thread:$0]  %s185, 256, %s187, %s172
        $region28: #{tpu_custom_call.1} parent=23 // pred_fallthru
          _
      $region24: #{tpu_custom_call.1} parent=5 // pred_fallthru
        _
      %p190 = scmp.le.s32.totalorder 1, %s15
      %p191 = scmp.lt.s32.totalorder %s15, 3
      %p192 = pnand %p190, %p191
      %p193 = pneg %p192
      // Predicated region
      $region29: #{tpu_custom_call.1} parent=5 // pred_check
        _
      $region30: #{tpu_custom_call.1} parent=5 // pred_check_branch
        %195 = sbr.rel (%p192) target = $region32
      $region31: #{tpu_custom_call.1} parent=5 // pred_region
        %s196 = ssub.s32 %s15, 1
        %s197 = sand.u32 %s94, 1
        %s198 = scalar_lea.sflag [#allocation3], %s197
        %s199 = sand.u32 %s94, 1
        %s200 = smul.addr %s199, 16
        %s201 = scalar_lea.vmem [#allocation2], %s200
        // Predicated region
        $region33: #{tpu_custom_call.1} parent=31 // pred_check
          %p202 = pneg %p107
        $region34: #{tpu_custom_call.1} parent=31 // pred_check_branch
          %204 = sbr.rel (%p202) target = $region36
        $region35: #{tpu_custom_call.1} parent=31 // pred_region
          %206 = dma.done %s198, 256
        $region36: #{tpu_custom_call.1} parent=31 // pred_fallthru
          _
        %p207 = scmp.lt.s32.totalorder %s24, 0
        %s208 = scalar_select %p207, %s24, 0
        %s209 = smul.addr %s208, 8
        %s210 = scalar_lea.vmem %s0, %s209
        %p211 = pneg %p53
        %p212 = pneg %p50
        %p213 = scmp.lt.s32.totalorder %s24, 0
        %s214 = scalar_select %p213, %s24, 0
        %s215 = smul.addr %s214, 8
        %s216 = scalar_lea.vmem %s1, %s215
        %p217 = pneg %p79
        %p218 = pneg %p76
        %s219 = sand.u32 %s94, 1
        %s220 = scalar_lea.sflag [#allocation3], %s219
        %s221 = sand.u32 %s94, 1
        %s222 = smul.addr %s221, 16
        %s223 = scalar_lea.vmem [#allocation2], %s222
        %p224 = pneg %p107
        %p225 = pneg %p104
        %p226 = pneg %p135
        %p227 = pneg %p132
        %s228 = sand.u32 %s122, 1
        %s229 = scalar_lea.sflag [#allocation4], %s228
        %s230 = sand.u32 %s122, 1
        %s231 = smul.addr %s230, 16
        %s232 = scalar_lea.vmem [#allocation5], %s231
        %p233 = scmp.lt.s32.totalorder %s24, 0
        %s234 = scalar_select %p233, %s24, 0
        %s235 = smul.addr %s234, 8
        %s236 = scalar_lea.vmem %s0, %s235
        %p237 = scmp.lt.s32.totalorder %s24, 0
        %s238 = scalar_select %p237, %s24, 0
        %s239 = smul.addr %s238, 8
        %s240 = scalar_lea.vmem %s1, %s239
        %s241 = smul.u32 2, %s25
        %s242 = smul.u32 2, %s25
        %v243 = vld [vmem:[%s201] sm:$0xff]
        %v244 = vld [vmem:[%s201 + $0x8] sm:$0xff]
        %v245 = vld [vmem:[%s236] sm:$0xff]
        %247 = vset.pattern.permute.xlu0 0
        %248 = vperm.xlu0 %247, %v245
        %v249 = vpop.permute.xlu0 %248
        %v251 = vmul.f32 %v243, %v249
        %v252 = vmul.f32 %v244, %v249
        %v253 = vld [vmem:[%s240] sm:$0xff]
        %255 = vset.pattern.permute.xlu0 0
        %256 = vperm.xlu0 %255, %v253
        %v257 = vpop.permute.xlu0 %256
        %v259 = vadd.f32 %v251, %v257
        %v260 = vadd.f32 %v252, %v257
        %261 = vst [vmem:[%s232] sm:$0xff] %v259
        %262 = vst [vmem:[%s232 + $0x8] sm:$0xff] %v260
        %s263 = sand.u32 %s122, 1
        %s264 = scalar_lea.sflag [#allocation4], %s263
        %s265 = sand.u32 %s122, 1
        %s266 = smul.addr %s265, 16
        %s267 = scalar_lea.vmem [#allocation5], %s266
        // Predicated region
        $region37: #{tpu_custom_call.1} parent=31 // pred_check
          %p268 = pneg %p132
        $region38: #{tpu_custom_call.1} parent=31 // pred_check_branch
          %270 = sbr.rel (%p268) target = $region40
        $region39: #{tpu_custom_call.1} parent=31 // pred_region
          %s271 = smul.u32 2, %s25
          %273 = vsyncadd %s264, 0
          %s274 = smul.addr %s24, 4
          %s275 = sadd.s32 %s271, %s274
          %s276 = smul.addr %s275, 8
          %s277 = scalar_lea.hbm %s3, %s276
          %s279 = sshll.u32 %s267, 4
          %s280 = int_to_ptr.vmem [resolvable:$true] %s279
          %s281 = sshll.u32 %s277, 4
          %s282 = int_to_ptr.hbm [resolvable:$true] %s281
          %284 = dma.vmem_to_hbm [thread:$0]  %s280, 256, %s282, %s264
        $region40: #{tpu_custom_call.1} parent=31 // pred_fallthru
          _
      $region32: #{tpu_custom_call.1} parent=5 // pred_fallthru
        _
      %p285 = scmp.le.s32.totalorder 2, %s15
      // Predicated region
      $region41: #{tpu_custom_call.1} parent=5 // pred_check
        %p286 = pneg %p285
      $region42: #{tpu_custom_call.1} parent=5 // pred_check_branch
        %288 = sbr.rel (%p286) target = $region44
      $region43: #{tpu_custom_call.1} parent=5 // pred_region
        %s289 = ssub.s32 %s15, 2
        // Predicated region
        $region45: #{tpu_custom_call.1} parent=43 // pred_check
          %p290 = pneg %p138
        $region46: #{tpu_custom_call.1} parent=43 // pred_check_branch
          %292 = sbr.rel (%p290) target = $region48
        $region47: #{tpu_custom_call.1} parent=43 // pred_region
          %s293 = sand.u32 %s123, 1
          %s294 = scalar_lea.sflag [#allocation4], %s293
          %s295 = sand.u32 %s123, 1
          %s296 = smul.addr %s295, 16
          %s297 = scalar_lea.vmem [#allocation5], %s296
          %299 = dma.done %s294, 256
        $region48: #{tpu_custom_call.1} parent=43 // pred_fallthru
          _
      $region44: #{tpu_custom_call.1} parent=5 // pred_fallthru
        _
    $region6: #{tpu_custom_call.1} parent=1 // loop_footer
      %s19 = sadd.s32 1, %s15
    $region7: #{tpu_custom_call.1} parent=1 // loop_footer_branch
      %14 = sbr.rel target = $region3
    $region8: #{tpu_custom_call.1} parent=1 // loop_exit
      _
    %300 = vsyncpa [#allocation3], 1
    %s301 = scalar_lea.sflag [#allocation3], 1
    %302 = vsyncpa %s301, 1
    %303 = vsyncpa [#allocation4], 1
    %s304 = scalar_lea.sflag [#allocation4], 1
    %305 = vsyncpa %s304, 1

</llo_original>
